<compile_context>
chip_gen: v7x
topology: tpu7x:2x2x1
jax: 0.10.0
libtpu: 0.0.40
codegen_flags: <defaults>
</compile_context>

<pallas_src>
import functools

import jax
import jax.numpy as jnp
from jax.experimental import pallas as pl
from jax.experimental.pallas import tpu as pltpu

_MAX_BN = 8            # cap batch elements per block (bounds in-kernel unroll)
_HEADROOM = 4 << 20    # compiler-internal scratch headroom


def _vmem_budget_bytes():
    """~75% of physical VMEM (v5e/v6e: 128 MiB -> 96 MiB, v7x: 64 MiB -> 48 MiB)."""
    try:
        cap = int(pltpu.get_tpu_info().vmem_capacity_bytes)
    except Exception:
        cap = 64 << 20   # conservative default (v7x-sized)
    return (cap * 3) // 4


def _se_kernel(x_ref, w1_ref, b1_ref, w2_ref, b2_ref, o_ref, *, inv_hw, bn):
    """Fused SE on a (bn, C, HW) block: pool -> conv1 -> ReLU -> conv2 -> hsig -> mul."""
    # Global avg pool: f32-accumulated lane reduce per batch element, kept
    # column-major (C on sublanes) so the scale broadcasts over lanes with no
    # relayout.  bn <= _MAX_BN so this unrolls cheaply.
    cols = [jnp.sum(x_ref[b], axis=1, keepdims=True, dtype=jnp.float32)
            for b in range(bn)]                                          # bn x (C, 1)
    pooled = cols[0] if bn == 1 else jnp.concatenate(cols, axis=1)       # (C, bn)
    pooled = pooled * inv_hw

    # Excitation: two tiny matmuls widened to bn columns (not width-1 matvecs).
    w1 = w1_ref[...].astype(jnp.float32)                                 # (Cr, C)
    w2 = w2_ref[...].astype(jnp.float32)                                 # (C, Cr)
    h = jnp.dot(w1, pooled, preferred_element_type=jnp.float32)
    h = jnp.maximum(h + b1_ref[...].astype(jnp.float32), 0.0)            # (Cr, bn)
    s = jnp.dot(w2, h, preferred_element_type=jnp.float32)
    s = s + b2_ref[...].astype(jnp.float32)                              # (C, bn)
    # Hardsigmoid: clip(s/6 + 0.5, 0, 1) (multiply form, no vector divide).
    s = jnp.clip(s * (1.0 / 6.0) + 0.5, 0.0, 1.0)

    # identity * scale: re-read x_ref (short live range), native-dtype multiply,
    # (C, 1) scale column broadcast over the lane axis.
    for b in range(bn):
        o_ref[b] = x_ref[b] * s[:, b:b + 1].astype(o_ref.dtype)


def _scale_mul_kernel(x_ref, s_ref, o_ref):
    # x_ref: (1, C, chunk); s_ref: (1, C, 1) already in x's dtype.
    o_ref[...] = x_ref[...] * s_ref[...]


@functools.partial(jax.jit, static_argnames=("vmem_budget_bytes",))
def se_layer(x_nchw, w1, b1, w2, b2, *, vmem_budget_bytes=None):
    """SELayer forward.  x: (N, C, H, W); w1: (Cr, C); b1: (Cr,); w2: (C, Cr); b2: (C,)."""
    N, C, H, W = x_nchw.shape
    Cr = w1.shape[0]
    HW = H * W
    itemsize = jnp.dtype(x_nchw.dtype).itemsize

    x = x_nchw.reshape(N, C, HW)
    b1c = b1.reshape(Cr, 1)
    b2c = b2.reshape(C, 1)

    weight_bytes = int(w1.size * w1.dtype.itemsize + b1.size * b1.dtype.itemsize
                       + w2.size * w2.dtype.itemsize + b2.size * b2.dtype.itemsize)
    hard_cap = _vmem_budget_bytes()                       # never exceed physical VMEM
    budget = int(vmem_budget_bytes) if vmem_budget_bytes is not None else hard_cap

    # ---- choose Bn for the fused single-pass path --------------------------
    per_item = 4 * C * HW * itemsize                      # in + out, double-buffered
    fixed = 4 * weight_bytes + _HEADROOM
    bn = None
    if budget - fixed >= per_item:
        max_bn = min((budget - fixed) // per_item, _MAX_BN)
        cands = [d for d in range(1, N + 1) if N % d == 0 and d <= max_bn]
        if cands:
            proper = [d for d in cands if N // d >= 2]    # keep both v7x cores busy
            bn = max(proper) if proper else max(cands)

    if bn is not None:
        # -------- fused single-pass path (2 HBM passes over x) --------------
        needed = bn * per_item + fixed
        vmem_limit = int(min(max(needed, 32 << 20), hard_cap))
        cost = pl.CostEstimate(
            flops=int(N * (3 * C * HW + 4 * C * Cr)),
            transcendentals=0,
            bytes_accessed=int(2 * N * C * HW * itemsize + weight_bytes),
        )
        kernel = functools.partial(_se_kernel, inv_hw=1.0 / HW, bn=bn)
        out = pl.pallas_call(
            kernel,
            out_shape=jax.ShapeDtypeStruct((N, C, HW), x.dtype),
            grid_spec=pltpu.PrefetchScalarGridSpec(
                num_scalar_prefetch=0,
                grid=(N // bn,),
                in_specs=[
                    pl.BlockSpec((bn, C, HW), lambda n: (n, 0, 0)),
                    pl.BlockSpec((Cr, C), lambda n: (0, 0)),
                    pl.BlockSpec((Cr, 1), lambda n: (0, 0)),
                    pl.BlockSpec((C, Cr), lambda n: (0, 0)),
                    pl.BlockSpec((C, 1), lambda n: (0, 0)),
                ],
                out_specs=pl.BlockSpec((bn, C, HW), lambda n: (n, 0, 0)),
            ),
            compiler_params=pltpu.CompilerParams(
                dimension_semantics=("parallel",),
                vmem_limit_bytes=vmem_limit,
            ),
            cost_estimate=cost,
        )(x, w1, b1c, w2, b2c)
        return out.reshape(N, C, H, W)

    # -------- HW-chunked fallback (3 HBM passes; oversized C*HW, e.g. v7x) ---
    # Sweep 1 (plain XLA reduce, ~roofline): pooled mean + tiny excitation chain.
    pooled = jnp.mean(x.astype(jnp.float32), axis=2)                         # (N, C)
    h = jnp.maximum(pooled @ w1.astype(jnp.float32).T + b1.astype(jnp.float32), 0.0)
    s = h @ w2.astype(jnp.float32).T + b2.astype(jnp.float32)
    s = jnp.clip(s * (1.0 / 6.0) + 0.5, 0.0, 1.0)
    scale = s.astype(x.dtype).reshape(N, C, 1)

    # Sweep 2 (Pallas): apply per-(n, c) scale chunk-by-chunk, pipelined.
    if HW <= 128:
        chunk = HW
    else:
        avail = budget - _HEADROOM
        max_chunk = avail // (4 * C * itemsize) if avail > 0 else 0
        chunk = min(HW, max((max_chunk // 128) * 128, 128))
    n_chunks = pl.cdiv(HW, chunk)

    needed = 4 * C * chunk * itemsize + 4 * C * itemsize + _HEADROOM
    vmem_limit = int(min(max(needed, 32 << 20), hard_cap))
    cost = pl.CostEstimate(
        flops=int(N * C * HW),
        transcendentals=0,
        bytes_accessed=int(2 * N * C * HW * itemsize + N * C * itemsize),
    )
    out = pl.pallas_call(
        _scale_mul_kernel,
        out_shape=jax.ShapeDtypeStruct((N, C, HW), x.dtype),
        grid_spec=pltpu.PrefetchScalarGridSpec(
            num_scalar_prefetch=0,
            grid=(N, n_chunks),
            in_specs=[
                pl.BlockSpec((1, C, chunk), lambda n, c: (n, 0, c)),
                pl.BlockSpec((1, C, 1), lambda n, c: (n, 0, 0)),
            ],
            out_specs=pl.BlockSpec((1, C, chunk), lambda n, c: (n, 0, c)),
        ),
        compiler_params=pltpu.CompilerParams(
            dimension_semantics=("parallel", "parallel"),
            vmem_limit_bytes=vmem_limit,
        ),
        cost_estimate=cost,
    )(x, scale)
    return out.reshape(N, C, H, W)


def _reference(x, w1, b1, w2, b2):
    # Pure-JAX reference matching PyTorch SELayer semantics (f32 math).
    xf = x.astype(jnp.float32)
    pooled = jnp.mean(xf, axis=(2, 3))                                   # (N, C)
    h = jnp.maximum(pooled @ w1.astype(jnp.float32).T + b1.astype(jnp.float32), 0.0)
    s = h @ w2.astype(jnp.float32).T + b2.astype(jnp.float32)
    s = jnp.clip((s + 3.0) / 6.0, 0.0, 1.0)
    return (xf * s[:, :, None, None]).astype(x.dtype)


if __name__ == "__main__":
    key = jax.random.PRNGKey(0)
    N, C, H, W = 2, 4, 16, 16
    reduction = 4
    Cr = max(C // reduction, 1)

    k_x, k_w1, k_b1, k_w2, k_b2, k_x4 = jax.random.split(key, 6)
    x = jax.random.normal(k_x, (N, C, H, W), dtype=jnp.float32)
    # Conv2d 1x1 weights flattened to 2-D, PyTorch-style 1-D biases.
    w1 = jax.random.normal(k_w1, (Cr, C), dtype=jnp.float32) * 0.5
    b1 = jax.random.normal(k_b1, (Cr,), dtype=jnp.float32) * 0.1
    w2 = jax.random.normal(k_w2, (C, Cr), dtype=jnp.float32) * 0.5
    b2 = jax.random.normal(k_b2, (C,), dtype=jnp.float32) * 0.1

    # Main fused path (Bn = 1, grid = 2).
    out = jax.block_until_ready(se_layer(x, w1, b1, w2, b2))
    ref = _reference(x, w1, b1, w2, b2)
    assert out.shape == x.shape and out.dtype == x.dtype
    assert jnp.allclose(out, ref, atol=1e-5, rtol=1e-5)

    # Batched-block path (Bn = 2, grid = 2).
    x4 = jax.random.normal(k_x4, (4, C, H, W), dtype=jnp.float32)
    out4 = jax.block_until_ready(se_layer(x4, w1, b1, w2, b2))
    assert jnp.allclose(out4, _reference(x4, w1, b1, w2, b2), atol=1e-5, rtol=1e-5)

    # Force the HW-chunked fallback (as would trigger on v7x for oversized C*HW).
    out_fb = jax.block_until_ready(se_layer(x, w1, b1, w2, b2, vmem_budget_bytes=1 << 20))
    assert jnp.allclose(out_fb, ref, atol=1e-5, rtol=1e-5)

    print("KERNEL_OK")
</pallas_src>

<mosaic_0001>
module attributes {stable_mosaic.version = 11 : i64} {
  func.func @_se_kernel(%arg0: i32, %arg1: memref<1x4x256xf32, #tpu.memory_space<vmem>>, %arg2: memref<1x4xf32, #tpu.memory_space<vmem>>, %arg3: memref<1x1xf32, #tpu.memory_space<vmem>>, %arg4: memref<4x1xf32, #tpu.memory_space<vmem>>, %arg5: memref<4x1xf32, #tpu.memory_space<vmem>>, %arg6: memref<1x4x256xf32, #tpu.memory_space<vmem>>) attributes {dimension_semantics = [#tpu.dimension_semantics<parallel>], iteration_bounds = array<i64: 2>, scalar_prefetch = 0 : i64, scratch_operands = 0 : i64, tpu.core_type = #tpu.core_type<tc>, window_params = [{transform_indices = @transform_0, window_bounds = array<i64: 1, 4, 256>}, {pipeline_mode = #tpu.pipeline_mode<synchronous>, transform_indices = @transform_1, window_bounds = array<i64: 1, 4>}, {pipeline_mode = #tpu.pipeline_mode<synchronous>, transform_indices = @transform_2, window_bounds = array<i64: 1, 1>}, {pipeline_mode = #tpu.pipeline_mode<synchronous>, transform_indices = @transform_3, window_bounds = array<i64: 4, 1>}, {pipeline_mode = #tpu.pipeline_mode<synchronous>, transform_indices = @transform_4, window_bounds = array<i64: 4, 1>}, {transform_indices = @transform_5, window_bounds = array<i64: 1, 4, 256>}]} {
    %c0 = arith.constant 0 : index
    %c0_0 = arith.constant 0 : index
    %c0_1 = arith.constant 0 : index
    %0 = vector.load %arg1[%c0, %c0_0, %c0_1] : memref<1x4x256xf32, #tpu.memory_space<vmem>>, vector<1x4x256xf32>
    %1 = vector.shape_cast %0 : vector<1x4x256xf32> to vector<4x256xf32>
    %cst = arith.constant dense<0.000000e+00> : vector<4xf32>
    %2 = vector.multi_reduction <add>, %1, %cst [1] : vector<4x256xf32> to vector<4xf32>
    %3 = vector.shape_cast %2 : vector<4xf32> to vector<4x1xf32>
    %cst_2 = arith.constant 3.906250e-03 : f32
    %4 = vector.broadcast %cst_2 : f32 to vector<4x1xf32>
    %5 = arith.mulf %3, %4 : vector<4x1xf32>
    %c0_3 = arith.constant 0 : index
    %c0_4 = arith.constant 0 : index
    %6 = vector.load %arg2[%c0_3, %c0_4] : memref<1x4xf32, #tpu.memory_space<vmem>>, vector<1x4xf32>
    %c0_5 = arith.constant 0 : index
    %c0_6 = arith.constant 0 : index
    %7 = vector.load %arg4[%c0_5, %c0_6] : memref<4x1xf32, #tpu.memory_space<vmem>>, vector<4x1xf32>
    %cst_7 = arith.constant dense<0.000000e+00> : vector<1x1xf32>
    %8 = tpu.matmul %6, %5, %cst_7 {dimension_numbers = #tpu.dot_dimension_numbers<[1], [0], [0], [1], [0, 0, 1, 1], [], []>} : vector<1x4xf32>, vector<4x1xf32>, vector<1x1xf32> -> vector<1x1xf32>
    %c0_8 = arith.constant 0 : index
    %c0_9 = arith.constant 0 : index
    %9 = vector.load %arg3[%c0_8, %c0_9] : memref<1x1xf32, #tpu.memory_space<vmem>>, vector<1x1xf32>
    %10 = arith.addf %8, %9 : vector<1x1xf32>
    %cst_10 = arith.constant 0.000000e+00 : f32
    %11 = vector.broadcast %cst_10 : f32 to vector<1x1xf32>
    %12 = arith.maximumf %10, %11 : vector<1x1xf32>
    %cst_11 = arith.constant dense<0.000000e+00> : vector<4x1xf32>
    %13 = tpu.matmul %7, %12, %cst_11 {dimension_numbers = #tpu.dot_dimension_numbers<[1], [0], [0], [1], [0, 0, 1, 1], [], []>} : vector<4x1xf32>, vector<1x1xf32>, vector<4x1xf32> -> vector<4x1xf32>
    %c0_12 = arith.constant 0 : index
    %c0_13 = arith.constant 0 : index
    %14 = vector.load %arg5[%c0_12, %c0_13] : memref<4x1xf32, #tpu.memory_space<vmem>>, vector<4x1xf32>
    %15 = arith.addf %13, %14 : vector<4x1xf32>
    %cst_14 = arith.constant 0.166666672 : f32
    %16 = vector.broadcast %cst_14 : f32 to vector<4x1xf32>
    %17 = arith.mulf %15, %16 : vector<4x1xf32>
    %cst_15 = arith.constant 5.000000e-01 : f32
    %18 = vector.broadcast %cst_15 : f32 to vector<4x1xf32>
    %19 = arith.addf %17, %18 : vector<4x1xf32>
    %cst_16 = arith.constant 0.000000e+00 : f32
    %cst_17 = arith.constant 1.000000e+00 : f32
    %20 = vector.broadcast %cst_16 : f32 to vector<4x1xf32>
    %21 = arith.maximumf %20, %19 : vector<4x1xf32>
    %22 = vector.broadcast %cst_17 : f32 to vector<4x1xf32>
    %23 = arith.minimumf %22, %21 : vector<4x1xf32>
    %c0_18 = arith.constant 0 : index
    %c0_19 = arith.constant 0 : index
    %c0_20 = arith.constant 0 : index
    %24 = vector.load %arg1[%c0_18, %c0_19, %c0_20] : memref<1x4x256xf32, #tpu.memory_space<vmem>>, vector<1x4x256xf32>
    %25 = vector.shape_cast %24 : vector<1x4x256xf32> to vector<4x256xf32>
    %26 = vector.broadcast %23 : vector<4x1xf32> to vector<4x256xf32>
    %27 = arith.mulf %25, %26 : vector<4x256xf32>
    %c0_21 = arith.constant 0 : index
    %c0_22 = arith.constant 0 : index
    %c0_23 = arith.constant 0 : index
    %28 = vector.load %arg6[%c0_21, %c0_22, %c0_23] : memref<1x4x256xf32, #tpu.memory_space<vmem>>, vector<1x4x256xf32>
    %29 = vector.shape_cast %28 : vector<1x4x256xf32> to vector<4x256xf32>
    %30 = vector.shape_cast %27 : vector<4x256xf32> to vector<1x4x256xf32>
    tpu.vector_store %arg6[%c0_21, %c0_22, %c0_23], %30 {strides = array<i32>} : memref<1x4x256xf32, #tpu.memory_space<vmem>>, vector<1x4x256xf32>,
    return
  }
  func.func @transform_0(%arg0: i32) -> (i32, i32, i32) {
    %c0_i32 = arith.constant 0 : i32
    %c0_i32_0 = arith.constant 0 : i32
    %c0_i32_1 = arith.constant 0 : i32
    return %arg0, %c0_i32, %c0_i32_0 : i32, i32, i32
  }
  func.func @transform_1(%arg0: i32) -> (i32, i32) {
    %c0_i32 = arith.constant 0 : i32
    %c0_i32_0 = arith.constant 0 : i32
    %c0_i32_1 = arith.constant 0 : i32
    return %c0_i32, %c0_i32_0 : i32, i32
  }
  func.func @transform_2(%arg0: i32) -> (i32, i32) {
    %c0_i32 = arith.constant 0 : i32
    %c0_i32_0 = arith.constant 0 : i32
    %c0_i32_1 = arith.constant 0 : i32
    return %c0_i32, %c0_i32_0 : i32, i32
  }
  func.func @transform_3(%arg0: i32) -> (i32, i32) {
    %c0_i32 = arith.constant 0 : i32
    %c0_i32_0 = arith.constant 0 : i32
    %c0_i32_1 = arith.constant 0 : i32
    return %c0_i32, %c0_i32_0 : i32, i32
  }
  func.func @transform_4(%arg0: i32) -> (i32, i32) {
    %c0_i32 = arith.constant 0 : i32
    %c0_i32_0 = arith.constant 0 : i32
    %c0_i32_1 = arith.constant 0 : i32
    return %c0_i32, %c0_i32_0 : i32, i32
  }
  func.func @transform_5(%arg0: i32) -> (i32, i32, i32) {
    %c0_i32 = arith.constant 0 : i32
    %c0_i32_0 = arith.constant 0 : i32
    %c0_i32_1 = arith.constant 0 : i32
    return %arg0, %c0_i32, %c0_i32_0 : i32, i32, i32
  }
}

</mosaic_0001>

<llo_original>
// kernel: se_layer.1
$region0: #{se_layer.1}
  #allocation0 [shape = 'u32[]', space=smem, size = 0x4, offset = 0x4, fixed_abs, tag = 'smem constant byte address 0x4 - core index']
  #allocation1 [shape = 'u32[144,128]{1,0:T(1,128)}', space=vmem, size = 0x12000, scoped, tag = 'internal scratch']
  #allocation2 [shape = 'f32[1,1]{1,0:T(1,128)S(1)}', space=vmem, size = 0x200, scoped, tag = 'scoped memory for se_layer.1']
  %s0 = inlined_call_operand.vmem [shape: f32[2,4,256], index: 0, kind: input, shape index: {}]
  %s1 = inlined_call_operand.vmem [shape: f32[1,4], index: 1, kind: input, shape index: {}]
  %s2 = inlined_call_operand.<no memory space> [shape: f32[1,1], index: 2, kind: input, shape index: {}]
  %s3 = inlined_call_operand.vmem [shape: f32[4,1], index: 3, kind: input, shape index: {}]
  %s4 = inlined_call_operand.vmem [shape: f32[4,1], index: 4, kind: input, shape index: {}]
  %s5 = inlined_call_operand.vmem [shape: f32[2,4,256], index: 5, kind: output, shape index: {}]
  %s6 = sld [smem:[#allocation0]]
  $region53: #{se_layer.1} parent=0
    _
  %s8 = ssub.s32 1, %s6
  %s9 = scalar_select 0, %s8, %s6
  %v10 = vstv %s2
  %11 = vst [vmem:[#allocation2] sm:$0x1] %v10
  loop: start=0, step=1, limit=4
  $region2: #{se_layer.1} parent=0 // loop_pre_header
    _
  $region3: #{se_layer.1} parent=0 // loop_header
    %s13 = sphi 0, %s17
    %p14 = scmp.ge.s32.totalorder %s13, 4
    %s23 = sphi 0, %s25
    %s26 = sphi 0, %s23
    %s27 = sphi 0, %s26
    %s43 = sphi 0, %s27
    %s47 = sphi 0, %s47
    %s49 = sphi 0, %s47
    %s50 = sphi 0, %s49
    %s64 = sphi 0, %s50
    %s68 = sphi 0, %s68
    %s70 = sphi 0, %s68
    %s71 = sphi 0, %s70
    %s85 = sphi 0, %s71
    %s89 = sphi 0, %s89
    %s91 = sphi 0, %s89
    %s92 = sphi 0, %s91
    %s106 = sphi 0, %s92
    %s110 = sphi 0, %s110
    %s112 = sphi 0, %s110
    %s113 = sphi 0, %s112
    %s127 = sphi 0, %s113
    %s133 = sphi 0, %s135
    %s136 = sphi 0, %s133
    %s137 = sphi 0, %s136
    %s153 = sphi 0, %s137
  $region4: #{se_layer.1} parent=0 // loop_header_branch
    %16 = sbr.rel (%p14) target = $region8
  $region5: #{se_layer.1} parent=0 // loop_body
    %s18 = ssub.s32 %s13, 1
    %s19 = ssub.s32 %s13, 2
    %s20 = sadd.s32 %s13, 1
    %s21 = ssub.s32 %s13, %s20
    %p22 = scmp.eq.s32.totalorder %s21, 0
    %s24 = sadd.s32 %s23, 1
    %s25 = scalar_select %p22, %s23, %s24
    %p28 = pneg %p22
    %p29 = scmp.eq.s32.totalorder %s13, 1
    %p30 = por %p28, %p29
    %p31 = scmp.ne.s32.totalorder %s23, %s26
    %p32 = scmp.eq.s32.totalorder %s13, 0
    %p33 = por %p31, %p32
    %p34 = scmp.ne.s32.totalorder %s23, %s26
    %p35 = scmp.eq.s32.totalorder %s18, 1
    %p36 = por %p34, %p35
    %p37 = scmp.ne.s32.totalorder %s26, %s27
    %p38 = scmp.eq.s32.totalorder %s18, 0
    %p39 = por %p37, %p38
    %p40 = scmp.ne.s32.totalorder %s26, %s27
    %p41 = scmp.eq.s32.totalorder %s19, 1
    %p42 = por %p40, %p41
    %p44 = scmp.ne.s32.totalorder %s27, %s43
    %p45 = scmp.eq.s32.totalorder %s19, 0
    %p46 = por %p44, %p45
    %s48 = sadd.s32 %s47, 1
    %p51 = scmp.eq.s32.totalorder %s13, 1
    %p52 = scmp.ne.s32.totalorder %s47, %s49
    %p53 = scmp.eq.s32.totalorder %s13, 0
    %p54 = por %p52, %p53
    %p55 = scmp.ne.s32.totalorder %s47, %s49
    %p56 = scmp.eq.s32.totalorder %s18, 1
    %p57 = por %p55, %p56
    %p58 = scmp.ne.s32.totalorder %s49, %s50
    %p59 = scmp.eq.s32.totalorder %s18, 0
    %p60 = por %p58, %p59
    %p61 = scmp.ne.s32.totalorder %s49, %s50
    %p62 = scmp.eq.s32.totalorder %s19, 1
    %p63 = por %p61, %p62
    %p65 = scmp.ne.s32.totalorder %s50, %s64
    %p66 = scmp.eq.s32.totalorder %s19, 0
    %p67 = por %p65, %p66
    %s69 = sadd.s32 %s68, 1
    %p72 = scmp.eq.s32.totalorder %s13, 1
    %p73 = scmp.ne.s32.totalorder %s68, %s70
    %p74 = scmp.eq.s32.totalorder %s13, 0
    %p75 = por %p73, %p74
    %p76 = scmp.ne.s32.totalorder %s68, %s70
    %p77 = scmp.eq.s32.totalorder %s18, 1
    %p78 = por %p76, %p77
    %p79 = scmp.ne.s32.totalorder %s70, %s71
    %p80 = scmp.eq.s32.totalorder %s18, 0
    %p81 = por %p79, %p80
    %p82 = scmp.ne.s32.totalorder %s70, %s71
    %p83 = scmp.eq.s32.totalorder %s19, 1
    %p84 = por %p82, %p83
    %p86 = scmp.ne.s32.totalorder %s71, %s85
    %p87 = scmp.eq.s32.totalorder %s19, 0
    %p88 = por %p86, %p87
    %s90 = sadd.s32 %s89, 1
    %p93 = scmp.eq.s32.totalorder %s13, 1
    %p94 = scmp.ne.s32.totalorder %s89, %s91
    %p95 = scmp.eq.s32.totalorder %s13, 0
    %p96 = por %p94, %p95
    %p97 = scmp.ne.s32.totalorder %s89, %s91
    %p98 = scmp.eq.s32.totalorder %s18, 1
    %p99 = por %p97, %p98
    %p100 = scmp.ne.s32.totalorder %s91, %s92
    %p101 = scmp.eq.s32.totalorder %s18, 0
    %p102 = por %p100, %p101
    %p103 = scmp.ne.s32.totalorder %s91, %s92
    %p104 = scmp.eq.s32.totalorder %s19, 1
    %p105 = por %p103, %p104
    %p107 = scmp.ne.s32.totalorder %s92, %s106
    %p108 = scmp.eq.s32.totalorder %s19, 0
    %p109 = por %p107, %p108
    %s111 = sadd.s32 %s110, 1
    %p114 = scmp.eq.s32.totalorder %s13, 1
    %p115 = scmp.ne.s32.totalorder %s110, %s112
    %p116 = scmp.eq.s32.totalorder %s13, 0
    %p117 = por %p115, %p116
    %p118 = scmp.ne.s32.totalorder %s110, %s112
    %p119 = scmp.eq.s32.totalorder %s18, 1
    %p120 = por %p118, %p119
    %p121 = scmp.ne.s32.totalorder %s112, %s113
    %p122 = scmp.eq.s32.totalorder %s18, 0
    %p123 = por %p121, %p122
    %p124 = scmp.ne.s32.totalorder %s112, %s113
    %p125 = scmp.eq.s32.totalorder %s19, 1
    %p126 = por %p124, %p125
    %p128 = scmp.ne.s32.totalorder %s113, %s127
    %p129 = scmp.eq.s32.totalorder %s19, 0
    %p130 = por %p128, %p129
    %s131 = ssub.s32 %s13, %s20
    %p132 = scmp.eq.s32.totalorder %s131, 0
    %s134 = sadd.s32 %s133, 1
    %s135 = scalar_select %p132, %s133, %s134
    %p138 = pneg %p132
    %p139 = scmp.eq.s32.totalorder %s13, 1
    %p140 = por %p138, %p139
    %p141 = scmp.ne.s32.totalorder %s133, %s136
    %p142 = scmp.eq.s32.totalorder %s13, 0
    %p143 = por %p141, %p142
    %p144 = scmp.ne.s32.totalorder %s133, %s136
    %p145 = scmp.eq.s32.totalorder %s18, 1
    %p146 = por %p144, %p145
    %p147 = scmp.ne.s32.totalorder %s136, %s137
    %p148 = scmp.eq.s32.totalorder %s18, 0
    %p149 = por %p147, %p148
    %p150 = scmp.ne.s32.totalorder %s136, %s137
    %p151 = scmp.eq.s32.totalorder %s19, 1
    %p152 = por %p150, %p151
    %p154 = scmp.ne.s32.totalorder %s137, %s153
    %p155 = scmp.eq.s32.totalorder %s19, 0
    %p156 = por %p154, %p155
    %p157 = scmp.le.s32.totalorder 1, %s13
    %p158 = scmp.lt.s32.totalorder %s13, 3
    %p159 = pnand %p157, %p158
    %p160 = pneg %p159
    // Predicated region
    $region9: #{se_layer.1} parent=5 // pred_check
      _
    $region10: #{se_layer.1} parent=5 // pred_check_branch
      %162 = sbr.rel (%p159) target = $region12
    $region11: #{se_layer.1} parent=5 // pred_region
      %s163 = ssub.s32 %s13, 1
      // Predicated region
      $region13: #{se_layer.1} parent=11 // pred_check
        %p164 = pneg %p60
      $region14: #{se_layer.1} parent=11 // pred_check_branch
        %166 = sbr.rel (%p164) target = $region16
      $region15: #{se_layer.1} parent=11 // pred_region
        _
      $region16: #{se_layer.1} parent=11 // pred_fallthru
        _
      // Predicated region
      $region17: #{se_layer.1} parent=11 // pred_check
        %p167 = pneg %p81
      $region18: #{se_layer.1} parent=11 // pred_check_branch
        %169 = sbr.rel (%p167) target = $region20
      $region19: #{se_layer.1} parent=11 // pred_region
        _
      $region20: #{se_layer.1} parent=11 // pred_fallthru
        _
      // Predicated region
      $region21: #{se_layer.1} parent=11 // pred_check
        %p170 = pneg %p102
      $region22: #{se_layer.1} parent=11 // pred_check_branch
        %172 = sbr.rel (%p170) target = $region24
      $region23: #{se_layer.1} parent=11 // pred_region
        _
      $region24: #{se_layer.1} parent=11 // pred_fallthru
        _
      // Predicated region
      $region25: #{se_layer.1} parent=11 // pred_check
        %p173 = pneg %p123
      $region26: #{se_layer.1} parent=11 // pred_check_branch
        %175 = sbr.rel (%p173) target = $region28
      $region27: #{se_layer.1} parent=11 // pred_region
        _
      $region28: #{se_layer.1} parent=11 // pred_fallthru
        _
    $region12: #{se_layer.1} parent=5 // pred_fallthru
      _
    %p176 = scmp.lt.s32.totalorder %s13, 2
    // Predicated region
    $region29: #{se_layer.1} parent=5 // pred_check
      %p177 = pneg %p176
    $region30: #{se_layer.1} parent=5 // pred_check_branch
      %179 = sbr.rel (%p177) target = $region32
    $region31: #{se_layer.1} parent=5 // pred_region
      // Predicated region
      $region33: #{se_layer.1} parent=31 // pred_check
        %p180 = pneg %p33
      $region34: #{se_layer.1} parent=31 // pred_check_branch
        %182 = sbr.rel (%p180) target = $region36
      $region35: #{se_layer.1} parent=31 // pred_region
        %p183 = scmp.lt.s32.totalorder %s13, 1
        %s184 = scalar_select %p183, %s13, 1
        %s185 = smul.addr %s184, 2
        %s186 = smul.addr %s185, 4
        %s187 = scalar_lea.vmem %s0, %s186
      $region36: #{se_layer.1} parent=31 // pred_fallthru
        _
    $region32: #{se_layer.1} parent=5 // pred_fallthru
      _
    %p188 = scmp.le.s32.totalorder 1, %s13
    %p189 = scmp.lt.s32.totalorder %s13, 3
    %p190 = pnand %p188, %p189
    %p191 = pneg %p190
    // Predicated region
    $region37: #{se_layer.1} parent=5 // pred_check
      _
    $region38: #{se_layer.1} parent=5 // pred_check_branch
      %193 = sbr.rel (%p190) target = $region40
    $region39: #{se_layer.1} parent=5 // pred_region
      %s194 = ssub.s32 %s13, 1
      %p195 = scmp.lt.s32.totalorder %s18, 1
      %s196 = scalar_select %p195, %s18, 1
      %s197 = smul.addr %s196, 2
      %s198 = smul.addr %s197, 4
      %s199 = scalar_lea.vmem %s0, %s198
      %p200 = pneg %p39
      %p201 = pneg %p36
      %p202 = pneg %p60
      %p203 = pneg %p57
      %p204 = pneg %p81
      %p205 = pneg %p78
      %p206 = pneg %p102
      %p207 = pneg %p99
      %p208 = pneg %p123
      %p209 = pneg %p120
      %p210 = pneg %p149
      %p211 = pneg %p146
      %p212 = scmp.lt.s32.totalorder %s18, 1
      %s213 = scalar_select %p212, %s18, 1
      %s214 = smul.addr %s213, 2
      %s215 = smul.addr %s214, 4
      %s216 = scalar_lea.vmem %s5, %s215
      %p217 = scmp.lt.s32.totalorder %s18, 1
      %s218 = scalar_select %p217, %s18, 1
      %s219 = smul.addr %s218, 2
      %s220 = smul.addr %s219, 4
      %s221 = scalar_lea.vmem %s0, %s220
      %p222 = scmp.lt.s32.totalorder %s18, 1
      %s223 = scalar_select %p222, %s18, 1
      %s224 = smul.addr %s223, 2
      %s225 = smul.addr %s224, 4
      %s226 = scalar_lea.vmem %s5, %s225
      %v227 = vld [vmem:[%s221] sm:$0xff]
      %v229 = vcombine.high %v227, %v227
      %vm231 = vcmask 1043456
      %v232 = vsel %vm231, %v227, 0.0
      %v233 = vsel %vm231, %v229, 0.0
      %v234 = vadd.f32 %v232, %v233
      %235 = vadd.xlane.f32.xlu0 %v234
      %v236 = vpop.xlane.xlu0 %235
      %v237 = vmul.f32 %v236, 0.00390625
      %v238 = vld [vmem:[%s1] sm:$0x1]
      %v239 = vld [vmem:[%s3] sm:$0xf]
      %v240 = vld [vmem:[#allocation2] sm:$0x1]
      %vm241 = vcmask 31744
      %v243 = vsel %vm241, %v238, 0
      %v246 = vsel %vm231, %v237, 0
      %248 = vmatprep.subr.mxu0 0.0
      %249 = vmatpush1.msra.mxu0 %v246
      %250 = vmatprep.subr.mxu0 0.0
      %251 = vmatpush1.msra.mxu0 0.0
      %252 = vmatprep.subr.mxu0 0.0
      %253 = vmatpush1.msra.mxu0 0.0
      %254 = vmatprep.subr.mxu0 0.0
      %255 = vmatpush1.msra.mxu0 0.0
      %256 = vmatprep.subr.mxu0 0.0
      %257 = vmatpush1.msra.mxu0 0.0
      %258 = vmatprep.subr.mxu0 0.0
      %259 = vmatpush1.msra.mxu0 0.0
      %260 = vmatprep.subr.mxu0 0.0
      %261 = vmatpush1.msra.mxu0 0.0
      %262 = vmatprep.subr.mxu0 0.0
      %263 = vmatpush1.msra.mxu0 0.0
      %264 = vmatprep.subr.mxu0 0.0
      %265 = vmatpush1.msra.mxu0 0.0
      %266 = vmatprep.subr.mxu0 0.0
      %267 = vmatpush1.msra.mxu0 0.0
      %268 = vmatprep.subr.mxu0 0.0
      %269 = vmatpush1.msra.mxu0 0.0
      %270 = vmatprep.subr.mxu0 0.0
      %271 = vmatpush1.msra.mxu0 0.0
      %272 = vmatprep.subr.mxu0 0.0
      %273 = vmatpush1.msra.mxu0 0.0
      %274 = vmatprep.subr.mxu0 0.0
      %275 = vmatpush1.msra.mxu0 0.0
      %276 = vmatprep.subr.mxu0 0.0
      %277 = vmatpush1.msra.mxu0 0.0
      %278 = vmatprep.subr.mxu0 0.0
      %279 = vmatpush1.msra.mxu0 0.0
      %280 = vmatprep.subr.mxu0 0.0
      %281 = vmatpush1.msra.mxu0 0.0
      %282 = vmatprep.subr.mxu0 0.0
      %283 = vmatpush1.msra.mxu0 0.0
      %284 = vmatprep.subr.mxu0 0.0
      %285 = vmatpush1.msra.mxu0 0.0
      %286 = vmatprep.subr.mxu0 0.0
      %287 = vmatpush1.msra.mxu0 0.0
      %288 = vmatprep.subr.mxu0 0.0
      %289 = vmatpush1.msra.mxu0 0.0
      %290 = vmatprep.subr.mxu0 0.0
      %291 = vmatpush1.msra.mxu0 0.0
      %292 = vmatprep.subr.mxu0 0.0
      %293 = vmatpush1.msra.mxu0 0.0
      %294 = vmatprep.subr.mxu0 0.0
      %295 = vmatpush1.msra.mxu0 0.0
      %296 = vmatprep.subr.mxu0 0.0
      %297 = vmatpush1.msra.mxu0 0.0
      %298 = vmatprep.subr.mxu0 0.0
      %299 = vmatpush1.msra.mxu0 0.0
      %300 = vmatprep.subr.mxu0 0.0
      %301 = vmatpush1.msra.mxu0 0.0
      %302 = vmatprep.subr.mxu0 0.0
      %303 = vmatpush1.msra.mxu0 0.0
      %304 = vmatprep.subr.mxu0 0.0
      %305 = vmatpush1.msra.mxu0 0.0
      %306 = vmatprep.subr.mxu0 0.0
      %307 = vmatpush1.msra.mxu0 0.0
      %308 = vmatprep.subr.mxu0 0.0
      %309 = vmatpush1.msra.mxu0 0.0
      %310 = vmatprep.subr.mxu0 0.0
      %311 = vmatpush1.msra.mxu0 0.0
      %312 = vmatprep.mubr.f32.mxu0 0.0
      %313 = vmatmul.mubr.f32.gmra.mrb[0].mxu0 %v243
      %v314 = vpop.f32.mrb[0].mxu0
      %v315 = vadd.f32 %v240, %v314
      %v316 = vpop.f32.mrb[0].mxu0
      %317 = vdwg.mxu0
      %v318 = vmax.f32 %v315, 0.0
      %v319 = vld [vmem:[%s4] sm:$0xf]
      %vm320 = vcmask 7168
      %v322 = vsel %vm320, %v239, 0
      %vm324 = vcmask 1040384
      %v326 = vsel %vm324, %v318, 0
      %328 = vmatprep.subr.mxu0 0.0
      %329 = vmatpush1.msra.mxu0 %v326
      %330 = vmatprep.subr.mxu0 0.0
      %331 = vmatpush1.msra.mxu0 0.0
      %332 = vmatprep.subr.mxu0 0.0
      %333 = vmatpush1.msra.mxu0 0.0
      %334 = vmatprep.subr.mxu0 0.0
      %335 = vmatpush1.msra.mxu0 0.0
      %336 = vmatprep.subr.mxu0 0.0
      %337 = vmatpush1.msra.mxu0 0.0
      %338 = vmatprep.subr.mxu0 0.0
      %339 = vmatpush1.msra.mxu0 0.0
      %340 = vmatprep.subr.mxu0 0.0
      %341 = vmatpush1.msra.mxu0 0.0
      %342 = vmatprep.subr.mxu0 0.0
      %343 = vmatpush1.msra.mxu0 0.0
      %344 = vmatprep.subr.mxu0 0.0
      %345 = vmatpush1.msra.mxu0 0.0
      %346 = vmatprep.subr.mxu0 0.0
      %347 = vmatpush1.msra.mxu0 0.0
      %348 = vmatprep.subr.mxu0 0.0
      %349 = vmatpush1.msra.mxu0 0.0
      %350 = vmatprep.subr.mxu0 0.0
      %351 = vmatpush1.msra.mxu0 0.0
      %352 = vmatprep.subr.mxu0 0.0
      %353 = vmatpush1.msra.mxu0 0.0
      %354 = vmatprep.subr.mxu0 0.0
      %355 = vmatpush1.msra.mxu0 0.0
      %356 = vmatprep.subr.mxu0 0.0
      %357 = vmatpush1.msra.mxu0 0.0
      %358 = vmatprep.subr.mxu0 0.0
      %359 = vmatpush1.msra.mxu0 0.0
      %360 = vmatprep.subr.mxu0 0.0
      %361 = vmatpush1.msra.mxu0 0.0
      %362 = vmatprep.subr.mxu0 0.0
      %363 = vmatpush1.msra.mxu0 0.0
      %364 = vmatprep.subr.mxu0 0.0
      %365 = vmatpush1.msra.mxu0 0.0
      %366 = vmatprep.subr.mxu0 0.0
      %367 = vmatpush1.msra.mxu0 0.0
      %368 = vmatprep.subr.mxu0 0.0
      %369 = vmatpush1.msra.mxu0 0.0
      %370 = vmatprep.subr.mxu0 0.0
      %371 = vmatpush1.msra.mxu0 0.0
      %372 = vmatprep.subr.mxu0 0.0
      %373 = vmatpush1.msra.mxu0 0.0
      %374 = vmatprep.subr.mxu0 0.0
      %375 = vmatpush1.msra.mxu0 0.0
      %376 = vmatprep.subr.mxu0 0.0
      %377 = vmatpush1.msra.mxu0 0.0
      %378 = vmatprep.subr.mxu0 0.0
      %379 = vmatpush1.msra.mxu0 0.0
      %380 = vmatprep.subr.mxu0 0.0
      %381 = vmatpush1.msra.mxu0 0.0
      %382 = vmatprep.subr.mxu0 0.0
      %383 = vmatpush1.msra.mxu0 0.0
      %384 = vmatprep.subr.mxu0 0.0
      %385 = vmatpush1.msra.mxu0 0.0
      %386 = vmatprep.subr.mxu0 0.0
      %387 = vmatpush1.msra.mxu0 0.0
      %388 = vmatprep.subr.mxu0 0.0
      %389 = vmatpush1.msra.mxu0 0.0
      %390 = vmatprep.subr.mxu0 0.0
      %391 = vmatpush1.msra.mxu0 0.0
      %392 = vmatprep.mubr.f32.mxu0 0.0
      %393 = vmatmul.mubr.f32.gmra.mrb[0].mxu0 %v322
      %v394 = vpop.f32.mrb[0].mxu0
      %v395 = vadd.f32 %v319, %v394
      %v396 = vpop.f32.mrb[0].mxu0
      %397 = vdwg.mxu0
      %v398 = vmul.f32 %v395, 0.16666667
      %v399 = vadd.f32 %v398, 0.5
      %v400 = vmax.f32 %v399, 0.0
      %v401 = vmin.f32 %v400, 1.0
      %403 = vset.pattern.permute.xlu0 0
      %404 = vperm.xlu0 %403, %v401
      %v405 = vpop.permute.xlu0 %404
      %v407 = vunpack.c.l.s4 839922192
      %v408 = vunpack.c.0.s8 %v407
      %v409 = vlaneseq
      %v410 = vshrl.u32 %v409, 7
      %v411 = vsub.s32 %v408, %v410
      %v412 = vrot.slane %v405, %v411
      %v414 = vmul.f32 %v227, %v412
      %415 = vst [vmem:[%s226] sm:$0xff] %v414
      %p416 = scmp.lt.s32.totalorder %s18, 1
      %s417 = scalar_select %p416, %s18, 1
      %s418 = smul.addr %s417, 2
      %s419 = smul.addr %s418, 4
      %s420 = scalar_lea.vmem %s5, %s419
      // Predicated region
      $region41: #{se_layer.1} parent=39 // pred_check
        %p421 = pneg %p146
      $region42: #{se_layer.1} parent=39 // pred_check_branch
        %423 = sbr.rel (%p421) target = $region44
      $region43: #{se_layer.1} parent=39 // pred_region
        _
      $region44: #{se_layer.1} parent=39 // pred_fallthru
        _
    $region40: #{se_layer.1} parent=5 // pred_fallthru
      _
    %p424 = scmp.le.s32.totalorder 2, %s13
    // Predicated region
    $region45: #{se_layer.1} parent=5 // pred_check
      %p425 = pneg %p424
    $region46: #{se_layer.1} parent=5 // pred_check_branch
      %427 = sbr.rel (%p425) target = $region48
    $region47: #{se_layer.1} parent=5 // pred_region
      %s428 = ssub.s32 %s13, 2
      // Predicated region
      $region49: #{se_layer.1} parent=47 // pred_check
        %p429 = pneg %p152
      $region50: #{se_layer.1} parent=47 // pred_check_branch
        %431 = sbr.rel (%p429) target = $region52
      $region51: #{se_layer.1} parent=47 // pred_region
        %p432 = scmp.lt.s32.totalorder %s19, 1
        %s433 = scalar_select %p432, %s19, 1
        %s434 = smul.addr %s433, 2
        %s435 = smul.addr %s434, 4
        %s436 = scalar_lea.vmem %s5, %s435
      $region52: #{se_layer.1} parent=47 // pred_fallthru
        _
    $region48: #{se_layer.1} parent=5 // pred_fallthru
      _
  $region6: #{se_layer.1} parent=0 // loop_footer
    %s17 = sadd.s32 1, %s13
  $region7: #{se_layer.1} parent=0 // loop_footer_branch
    %12 = sbr.rel target = $region3
  $region8: #{se_layer.1} parent=0 // loop_exit
    _

</llo_original>
